<compile_context>
chip_gen: v7x
topology: tpu7x:2x2x1
jax: 0.10.0
libtpu: 0.0.40
codegen_flags: <defaults>
</compile_context>

<pallas_src>
import functools

import jax
import jax.numpy as jnp
from jax.experimental import pallas as pl
from jax.experimental.pallas import tpu as pltpu


# ------------------------------------------------------------------ helpers

def _round_up(x, m):
    return ((x + m - 1) // m) * m


def _dtype_bytes(dt):
    return 2 if dt == jnp.bfloat16 else 4


def _pick_tile(dim, pref, align):
    """Largest multiple of `align` that divides `dim` and is <= pref.
    Falls back to the full extent when `dim` is small or not align-divisible."""
    if dim <= align or dim % align != 0:
        return dim
    t = (min(pref, dim) // align) * align
    while dim % t != 0:
        t -= align
    return t


@functools.lru_cache(maxsize=None)
def _vmem_cap_bytes():
    """Physical VMEM per TensorCore; conservative 64 MiB (v7x) fallback if unavailable."""
    try:
        cap = int(pltpu.get_tpu_info().vmem_capacity_bytes)
        if cap > 0:
            return cap
    except Exception:
        pass
    return 64 << 20


def _vmem_limit(est_bytes):
    """Generation-aware scoped-VMEM limit: generous (<= ~75% of physical: ~48 MiB on v7x,
    ~96 MiB on v5e/v6e) but never clamped below the kernel's own estimated requirement."""
    cap = _vmem_cap_bytes()
    budget = (3 * cap) // 4
    limit = min(budget, max(2 * est_bytes, 16 << 20))
    limit = max(limit, est_bytes + (2 << 20))   # never below the actual need
    return int(min(limit, cap))                 # never above physical


# ------------------------------------------------------------------ tiled linear (+ fused bias/ReLU)

def _linear_kernel(x_ref, w_ref, b_ref, o_ref, acc_ref, *, activation):
    k = pl.program_id(2)

    @pl.when(k == 0)
    def _init():
        acc_ref[...] = jnp.zeros_like(acc_ref)

    x = x_ref[...]
    if x.dtype != jnp.bfloat16:                 # in-kernel cast: VPU work hidden under the MXU
        x = x.astype(jnp.bfloat16)
    acc_ref[...] += jnp.dot(x, w_ref[...], preferred_element_type=jnp.float32)

    @pl.when(k == pl.num_programs(2) - 1)
    def _flush():
        y = acc_ref[...] + b_ref[...]           # f32 epilogue: bias (+ ReLU) fused
        if activation == "relu":
            y = jnp.maximum(y, 0.0)
        o_ref[...] = y.astype(o_ref.dtype)


def linear_tiled(x, w, b, *, activation=None, out_dtype=jnp.float32,
                 tm=512, tn=512, tk=512):
    """y = act(x @ w + b).  x: (Np, K) f32/bf16, w: (K, Dp) bf16, b: (1, Dp) f32.
    Np % 16 == 0, Dp % 128 == 0; K arbitrary (full-extent K block when not 128-aligned)."""
    Np, K = x.shape
    Dp = w.shape[1]
    tm = _pick_tile(Np, tm, 16)
    tk = _pick_tile(K, tk, 128)
    tn = _pick_tile(Dp, tn, 128)

    xb, ob = _dtype_bytes(x.dtype), _dtype_bytes(out_dtype)
    # double-buffered inputs/output + f32 accumulator scratch
    est = 2 * (tm * tk * xb + tk * tn * 2 + 8 * tn * 4 + tm * tn * ob) + tm * tn * 4

    cost = pl.CostEstimate(
        flops=2 * Np * Dp * K,
        transcendentals=0,
        bytes_accessed=Np * K * xb + K * Dp * 2 + Dp * 4 + Np * Dp * ob,
    )

    kern = functools.partial(_linear_kernel, activation=activation)
    return pl.pallas_call(
        kern,
        out_shape=jax.ShapeDtypeStruct((Np, Dp), out_dtype),
        grid=(Np // tm, Dp // tn, K // tk),
        in_specs=[
            pl.BlockSpec((tm, tk), lambda i, j, k: (i, k)),
            pl.BlockSpec((tk, tn), lambda i, j, k: (k, j)),
            pl.BlockSpec((1, tn), lambda i, j, k: (0, j)),
        ],
        out_specs=pl.BlockSpec((tm, tn), lambda i, j, k: (i, j)),
        scratch_shapes=[pltpu.VMEM((tm, tn), jnp.float32)],
        compiler_params=pltpu.CompilerParams(
            dimension_semantics=("parallel", "parallel", "arbitrary"),
            vmem_limit_bytes=_vmem_limit(est),
        ),
        cost_estimate=cost,
    )(x, w, b)


# ------------------------------------------------------------------ fully fused MLP kernel
# All layer weights stay resident in VMEM; the ReLU intermediates never touch HBM.

def _fused_mlp_kernel(*refs, num_layers):
    x_ref = refs[0]
    o_ref = refs[-1]
    h = x_ref[...]
    if h.dtype != jnp.bfloat16:
        h = h.astype(jnp.bfloat16)
    for l in range(num_layers):
        w_ref = refs[1 + 2 * l]
        b_ref = refs[2 + 2 * l]
        y = jnp.dot(h, w_ref[...], preferred_element_type=jnp.float32) + b_ref[...]
        if l < num_layers - 1:
            h = jnp.maximum(y, 0.0).astype(jnp.bfloat16)     # bf16 back to the MXU
        else:
            h = y
    o_ref[...] = h.astype(o_ref.dtype)


def _fused_vmem_estimate(tm, K0, Dp, weights, x_bytes, out_bytes):
    w_bytes = sum(int(w.shape[0]) * int(w.shape[1]) * 2 for w in weights)
    b_bytes = len(weights) * 8 * Dp * 4          # bias blocks pad to 8 sublanes
    # Constant-index weight blocks are only fetched once, but BlockSpec still allocates
    # 2 buffers for them, so count 2x; plus headroom for the live f32 intermediates.
    return (2 * tm * K0 * x_bytes + 2 * tm * Dp * out_bytes
            + 2 * (w_bytes + b_bytes) + 3 * tm * Dp * 4)


def mlp_fused(x, weights, biases, *, out_dtype=jnp.float32, tm=512):
    Np, K0 = x.shape
    Dp = int(weights[-1].shape[1])
    L = len(weights)
    tm = _pick_tile(Np, tm, 16)

    xb, ob = _dtype_bytes(x.dtype), _dtype_bytes(out_dtype)
    est = _fused_vmem_estimate(tm, K0, Dp, weights, xb, ob)

    flops, wbytes = 0, 0
    for w in weights:
        flops += 2 * Np * int(w.shape[0]) * int(w.shape[1])
        wbytes += int(w.shape[0]) * int(w.shape[1]) * 2
    cost = pl.CostEstimate(
        flops=flops, transcendentals=0,
        bytes_accessed=Np * K0 * xb + wbytes + L * Dp * 4 + Np * Dp * ob,
    )

    in_specs = [pl.BlockSpec((tm, K0), lambda i: (i, 0))]
    args = [x]
    for w, b in zip(weights, biases):
        kl = int(w.shape[0])
        in_specs.append(pl.BlockSpec((kl, Dp), lambda i: (0, 0)))   # constant block -> single fetch
        in_specs.append(pl.BlockSpec((1, Dp), lambda i: (0, 0)))
        args += [w, b]

    kern = functools.partial(_fused_mlp_kernel, num_layers=L)
    return pl.pallas_call(
        kern,
        out_shape=jax.ShapeDtypeStruct((Np, Dp), out_dtype),
        grid=(Np // tm,),
        in_specs=in_specs,
        out_specs=pl.BlockSpec((tm, Dp), lambda i: (i, 0)),
        compiler_params=pltpu.CompilerParams(
            dimension_semantics=("parallel",),
            vmem_limit_bytes=_vmem_limit(est),
        ),
        cost_estimate=cost,
    )(*args)


# ------------------------------------------------------------------ params + forward

def init_mlp_params(key, in_features, num_layers=2):
    """Mirrors nn.Linear default init; weights stored (in, out) so y = x @ w + b.
    Only the output/lane dim is padded to 128; the first layer's contraction dim stays at the
    natural in_features (no wasted MXU work / weight bytes for small D). Pre-cast to bf16 once."""
    D = in_features
    Dp = _round_up(D, 128)
    bound = 1.0 / (D ** 0.5)
    layers = []
    for idx, lk in enumerate(jax.random.split(key, num_layers)):
        wk, bk = jax.random.split(lk)
        w = jax.random.uniform(wk, (D, D), jnp.float32, -bound, bound)
        b = jax.random.uniform(bk, (D,), jnp.float32, -bound, bound)
        Kp = D if idx == 0 else Dp           # hidden layers inherit the 128-padded input dim
        w_p = jnp.zeros((Kp, Dp), jnp.bfloat16).at[:D, :D].set(w.astype(jnp.bfloat16))
        b_p = jnp.zeros((1, Dp), jnp.float32).at[0, :D].set(b)
        layers.append({"w": w, "b": b, "w_p": w_p, "b_p": b_p})
    return {"layers": layers}


@functools.partial(jax.jit, static_argnames=("force_tiled",))
def _mlp_apply(feats, weights, biases, *, force_tiled=False):
    """MLP on feats (..., D) -> (..., D). jit-ing fuses the (rare) row padding and the final
    (Np, Dp) -> (N, D) slice with their producer/consumer, avoiding extra HBM passes."""
    shape = feats.shape
    D = int(shape[-1])
    Dp = int(weights[-1].shape[1])
    L = len(weights)
    N = 1
    for s in shape[:-1]:
        N *= int(s)

    # bf16-friendly sublane multiple (>=16); large problems round to 256 so the M tile
    # never collapses below 256.
    Np = _round_up(N, 16) if N <= 512 else _round_up(N, 256)
    x = feats.reshape(N, D)
    if Np != N:
        x = jnp.pad(x, ((0, Np - N), (0, 0)))

    tm = _pick_tile(Np, 512, 16)
    est = _fused_vmem_estimate(tm, D, Dp, weights, _dtype_bytes(x.dtype), 4)
    use_fused = (not force_tiled) and est <= int(0.6 * _vmem_cap_bytes())

    if use_fused:
        out_p = mlp_fused(x, weights, biases, out_dtype=jnp.float32, tm=512)
    else:
        h = x
        for l in range(L):
            last = (l == L - 1)
            h = linear_tiled(h, weights[l], biases[l],
                             activation=None if last else "relu",
                             out_dtype=jnp.float32 if last else jnp.bfloat16)
        out_p = h

    return out_p[:N, :D].reshape(shape).astype(feats.dtype)


def mlp_forward(feats, params, target_shape=None, *, force_tiled=False):
    """Reproduces MLP.forward: returns (feats, model(feats), {}, {}). target_shape is ignored."""
    del target_shape
    Ws = tuple(l["w_p"] for l in params["layers"])
    Bs = tuple(l["b_p"] for l in params["layers"])
    out = _mlp_apply(feats, Ws, Bs, force_tiled=force_tiled)
    return feats, out, {}, {}


# ------------------------------------------------------------------ main

if __name__ == "__main__":
    B, T, C = 2, 8, 32        # batch, seq, in_features
    NUM_LAYERS = 2

    key = jax.random.PRNGKey(0)
    pkey, xkey = jax.random.split(key)
    params = init_mlp_params(pkey, C, NUM_LAYERS)
    feats = jax.random.normal(xkey, (B, T, C), dtype=jnp.float32)

    # fused single-kernel path (weights resident in VMEM, intermediates never touch HBM)
    prev, out_fused, losses, addl = mlp_forward(feats, params)
    # per-layer M/N/K-tiled path (exercised explicitly so both kernels run on TPU)
    _, out_tiled, _, _ = mlp_forward(feats, params, force_tiled=True)
    jax.block_until_ready(out_fused)
    jax.block_until_ready(out_tiled)

    # pure-JAX f32 reference
    h = feats.reshape(-1, C)
    for l, layer in enumerate(params["layers"]):
        h = h @ layer["w"] + layer["b"]
        if l < NUM_LAYERS - 1:
            h = jnp.maximum(h, 0.0)
    ref = h.reshape(B, T, C)

    assert prev.shape == feats.shape == out_fused.shape == out_tiled.shape
    # bf16 MXU inputs with f32 accumulation (intentional precision trade-off vs f32 reference)
    assert jnp.allclose(out_fused, ref, rtol=3e-2, atol=3e-2), float(jnp.max(jnp.abs(out_fused - ref)))
    assert jnp.allclose(out_tiled, ref, rtol=3e-2, atol=3e-2), float(jnp.max(jnp.abs(out_tiled - ref)))
    assert jnp.allclose(out_fused, out_tiled, rtol=3e-2, atol=3e-2)
    assert losses == {} and addl == {}
    print("KERNEL_OK")
</pallas_src>

<mosaic_0001>
module attributes {stable_mosaic.version = 11 : i64} {
  func.func @_fused_mlp_kernel(%arg0: i32, %arg1: memref<16x32xf32, #tpu.memory_space<vmem>>, %arg2: memref<32x128xbf16, #tpu.memory_space<vmem>>, %arg3: memref<1x128xf32, #tpu.memory_space<vmem>>, %arg4: memref<128x128xbf16, #tpu.memory_space<vmem>>, %arg5: memref<1x128xf32, #tpu.memory_space<vmem>>, %arg6: memref<16x128xf32, #tpu.memory_space<vmem>>) attributes {dimension_semantics = [#tpu.dimension_semantics<parallel>], iteration_bounds = array<i64: 1>, scalar_prefetch = 0 : i64, scratch_operands = 0 : i64, tpu.core_type = #tpu.core_type<tc>, window_params = [{transform_indices = @transform_0, window_bounds = array<i64: 16, 32>}, {pipeline_mode = #tpu.pipeline_mode<synchronous>, transform_indices = @transform_1, window_bounds = array<i64: 32, 128>}, {pipeline_mode = #tpu.pipeline_mode<synchronous>, transform_indices = @transform_2, window_bounds = array<i64: 1, 128>}, {pipeline_mode = #tpu.pipeline_mode<synchronous>, transform_indices = @transform_3, window_bounds = array<i64: 128, 128>}, {pipeline_mode = #tpu.pipeline_mode<synchronous>, transform_indices = @transform_4, window_bounds = array<i64: 1, 128>}, {transform_indices = @transform_5, window_bounds = array<i64: 16, 128>}]} {
    %c0 = arith.constant 0 : index
    %c0_0 = arith.constant 0 : index
    %0 = vector.load %arg1[%c0, %c0_0] : memref<16x32xf32, #tpu.memory_space<vmem>>, vector<16x32xf32>
    %1 = arith.truncf %0 : vector<16x32xf32> to vector<16x32xbf16>
    %c0_1 = arith.constant 0 : index
    %c0_2 = arith.constant 0 : index
    %2 = vector.load %arg2[%c0_1, %c0_2] : memref<32x128xbf16, #tpu.memory_space<vmem>>, vector<32x128xbf16>
    %cst = arith.constant dense<0.000000e+00> : vector<16x128xf32>
    %3 = tpu.matmul %1, %2, %cst {dimension_numbers = #tpu.dot_dimension_numbers<[1], [0], [0], [1], [0, 0, 1, 1], [], []>} : vector<16x32xbf16>, vector<32x128xbf16>, vector<16x128xf32> -> vector<16x128xf32>
    %c0_3 = arith.constant 0 : index
    %c0_4 = arith.constant 0 : index
    %4 = vector.load %arg3[%c0_3, %c0_4] : memref<1x128xf32, #tpu.memory_space<vmem>>, vector<1x128xf32>
    %5 = vector.broadcast %4 : vector<1x128xf32> to vector<16x128xf32>
    %6 = arith.addf %3, %5 : vector<16x128xf32>
    %cst_5 = arith.constant 0.000000e+00 : f32
    %7 = vector.broadcast %cst_5 : f32 to vector<16x128xf32>
    %8 = arith.maximumf %6, %7 : vector<16x128xf32>
    %9 = arith.truncf %8 : vector<16x128xf32> to vector<16x128xbf16>
    %c0_6 = arith.constant 0 : index
    %c0_7 = arith.constant 0 : index
    %10 = vector.load %arg4[%c0_6, %c0_7] : memref<128x128xbf16, #tpu.memory_space<vmem>>, vector<128x128xbf16>
    %cst_8 = arith.constant dense<0.000000e+00> : vector<16x128xf32>
    %11 = tpu.matmul %9, %10, %cst_8 {dimension_numbers = #tpu.dot_dimension_numbers<[1], [0], [0], [1], [0, 0, 1, 1], [], []>} : vector<16x128xbf16>, vector<128x128xbf16>, vector<16x128xf32> -> vector<16x128xf32>
    %c0_9 = arith.constant 0 : index
    %c0_10 = arith.constant 0 : index
    %12 = vector.load %arg5[%c0_9, %c0_10] : memref<1x128xf32, #tpu.memory_space<vmem>>, vector<1x128xf32>
    %13 = vector.broadcast %12 : vector<1x128xf32> to vector<16x128xf32>
    %14 = arith.addf %11, %13 : vector<16x128xf32>
    %c0_11 = arith.constant 0 : index
    %c0_12 = arith.constant 0 : index
    %15 = vector.load %arg6[%c0_11, %c0_12] : memref<16x128xf32, #tpu.memory_space<vmem>>, vector<16x128xf32>
    tpu.vector_store %arg6[%c0_11, %c0_12], %14 {strides = array<i32>} : memref<16x128xf32, #tpu.memory_space<vmem>>, vector<16x128xf32>,
    return
  }
  func.func @transform_0(%arg0: i32) -> (i32, i32) {
    %c0_i32 = arith.constant 0 : i32
    %c0_i32_0 = arith.constant 0 : i32
    return %arg0, %c0_i32 : i32, i32
  }
  func.func @transform_1(%arg0: i32) -> (i32, i32) {
    %c0_i32 = arith.constant 0 : i32
    %c0_i32_0 = arith.constant 0 : i32
    %c0_i32_1 = arith.constant 0 : i32
    return %c0_i32, %c0_i32_0 : i32, i32
  }
  func.func @transform_2(%arg0: i32) -> (i32, i32) {
    %c0_i32 = arith.constant 0 : i32
    %c0_i32_0 = arith.constant 0 : i32
    %c0_i32_1 = arith.constant 0 : i32
    return %c0_i32, %c0_i32_0 : i32, i32
  }
  func.func @transform_3(%arg0: i32) -> (i32, i32) {
    %c0_i32 = arith.constant 0 : i32
    %c0_i32_0 = arith.constant 0 : i32
    %c0_i32_1 = arith.constant 0 : i32
    return %c0_i32, %c0_i32_0 : i32, i32
  }
  func.func @transform_4(%arg0: i32) -> (i32, i32) {
    %c0_i32 = arith.constant 0 : i32
    %c0_i32_0 = arith.constant 0 : i32
    %c0_i32_1 = arith.constant 0 : i32
    return %c0_i32, %c0_i32_0 : i32, i32
  }
  func.func @transform_5(%arg0: i32) -> (i32, i32) {
    %c0_i32 = arith.constant 0 : i32
    %c0_i32_0 = arith.constant 0 : i32
    return %arg0, %c0_i32 : i32, i32
  }
}

</mosaic_0001>

<llo_original>
// kernel: _mlp_apply.1
$region0: #{_mlp_apply.1}
  #allocation0 [shape = 'u32[]', space=smem, size = 0x4, offset = 0x4, fixed_abs, tag = 'smem constant byte address 0x4 - core index']
  #allocation1 [shape = 'u32[144,128]{1,0:T(1,128)}', space=vmem, size = 0x12000, scoped, tag = 'internal scratch']
  %s0 = inlined_call_operand.hbm [shape: f32[16,32], index: 0, kind: input, shape index: {}]
  %s1 = inlined_call_operand.hbm [shape: bf16[32,128], index: 1, kind: input, shape index: {}]
  %s2 = inlined_call_operand.vmem [shape: f32[1,128], index: 2, kind: input, shape index: {}]
  %s3 = inlined_call_operand.hbm [shape: bf16[128,128], index: 3, kind: input, shape index: {}]
  %s4 = inlined_call_operand.vmem [shape: f32[1,128], index: 4, kind: input, shape index: {}]
  %s5 = inlined_call_operand.vmem [shape: f32[16,128], index: 5, kind: output, shape index: {}]
  %s6 = sld [smem:[#allocation0]]
  $region42: #{_mlp_apply.1} parent=0
    _
  %s8 = ssub.s32 1, %s6
  %s9 = scalar_select 0, %s8, %s6
  $region1: #{_mlp_apply.1} parent=0
    #allocation2 [shape = 'u8[8192]{0}', space=vmem, size = 0x2000, scoped, tag = 'input window, operand 0, single buffered']
    #allocation3 [shape = 's32[1]{0}', space=sflag, size = 0x4, scoped, tag = 'scoped memory for _mlp_apply.1']
    #allocation4 [shape = 'u8[8192]{0}', space=vmem, size = 0x2000, scoped, tag = 'input window, operand 1, single buffered']
    #allocation5 [shape = 's32[1]{0}', space=sflag, size = 0x4, scoped, tag = 'scoped memory for _mlp_apply.1']
    #allocation6 [shape = 'u8[32768]{0}', space=vmem, size = 0x8000, scoped, tag = 'input window, operand 3, single buffered']
    %10 = vsyncpa [#allocation3], 0
    %11 = vsyncpa [#allocation5], 0
    // Predicated region
    $region2: #{_mlp_apply.1} parent=1 // pred_check
      _
    $region3: #{_mlp_apply.1} parent=1 // pred_check_branch
      %13 = sbr.rel (0) target = $region5
    $region4: #{_mlp_apply.1} parent=1 // pred_region
      %s15 = ssub.s32 256, 256
      %16 = vsyncadd [#allocation3], %s15
      %s17 = sshll.u32 [#allocation2], 4
      %s18 = int_to_ptr.vmem [resolvable:$true] %s17
      %23 = dma.hbm_to_vmem [thread:$0]  %s0, 256, %s18, [#allocation3], 128, 128, 8
    $region5: #{_mlp_apply.1} parent=1 // pred_fallthru
      _
    // Predicated region
    $region6: #{_mlp_apply.1} parent=1 // pred_check
      _
    $region7: #{_mlp_apply.1} parent=1 // pred_check_branch
      %25 = sbr.rel (0) target = $region9
    $region8: #{_mlp_apply.1} parent=1 // pred_region
      %s27 = ssub.s32 256, 256
      %28 = vsyncadd [#allocation5], %s27
      %s29 = sshll.u32 [#allocation4], 4
      %s30 = int_to_ptr.vmem [resolvable:$true] %s29
      %35 = dma.hbm_to_vmem [thread:$0]  %s1, 256, %s30, [#allocation5], 64, 64, 4
    $region9: #{_mlp_apply.1} parent=1 // pred_fallthru
      _
    // Predicated region
    $region10: #{_mlp_apply.1} parent=1 // pred_check
      _
    $region11: #{_mlp_apply.1} parent=1 // pred_check_branch
      %37 = sbr.rel (0) target = $region13
    $region12: #{_mlp_apply.1} parent=1 // pred_region
      _
    $region13: #{_mlp_apply.1} parent=1 // pred_fallthru
      _
    // Predicated region
    $region14: #{_mlp_apply.1} parent=1 // pred_check
      _
    $region15: #{_mlp_apply.1} parent=1 // pred_check_branch
      %39 = sbr.rel (0) target = $region17
    $region16: #{_mlp_apply.1} parent=1 // pred_region
      %s41 = ssub.s32 1024, 1024
      %42 = vsyncadd [#allocation5], %s41
      %s43 = sshll.u32 [#allocation6], 4
      %s44 = int_to_ptr.vmem [resolvable:$true] %s43
      %49 = dma.hbm_to_vmem [thread:$0]  %s3, 1024, %s44, [#allocation5], 64, 64, 4
    $region17: #{_mlp_apply.1} parent=1 // pred_fallthru
      _
    // Predicated region
    $region18: #{_mlp_apply.1} parent=1 // pred_check
      _
    $region19: #{_mlp_apply.1} parent=1 // pred_check_branch
      %51 = sbr.rel (0) target = $region21
    $region20: #{_mlp_apply.1} parent=1 // pred_region
      _
    $region21: #{_mlp_apply.1} parent=1 // pred_fallthru
      _
    // Predicated region
    $region22: #{_mlp_apply.1} parent=1 // pred_check
      _
    $region23: #{_mlp_apply.1} parent=1 // pred_check_branch
      %53 = sbr.rel (0) target = $region25
    $region24: #{_mlp_apply.1} parent=1 // pred_region
      %54 = dma.done [#allocation3], 256
    $region25: #{_mlp_apply.1} parent=1 // pred_fallthru
      _
    // Predicated region
    $region26: #{_mlp_apply.1} parent=1 // pred_check
      _
    $region27: #{_mlp_apply.1} parent=1 // pred_check_branch
      %56 = sbr.rel (0) target = $region29
    $region28: #{_mlp_apply.1} parent=1 // pred_region
      %57 = dma.done [#allocation5], 256
    $region29: #{_mlp_apply.1} parent=1 // pred_fallthru
      _
    // Predicated region
    $region30: #{_mlp_apply.1} parent=1 // pred_check
      _
    $region31: #{_mlp_apply.1} parent=1 // pred_check_branch
      %59 = sbr.rel (0) target = $region33
    $region32: #{_mlp_apply.1} parent=1 // pred_region
      %60 = dma.done [#allocation5], 1024
    $region33: #{_mlp_apply.1} parent=1 // pred_fallthru
      _
    %v62 = vld [vmem:[#allocation2] sm:$0xff]
    %v63 = vld [vmem:[#allocation2 + $0x8] sm:$0xff]
    %v64 = vpack.c.bf16 %v63, %v62
    %v65 = vld [vmem:[#allocation4] sm:$0xf]
    %v66 = vld [vmem:[#allocation4 + $0x4] sm:$0xf]
    %v67 = vld [vmem:[#allocation4 + $0x8] sm:$0xf]
    %v68 = vld [vmem:[#allocation4 + $0xc] sm:$0xf]
    %v69 = vld [vmem:[%s2] sm:$0x1]
    %v71 = vlaneseq
    %v72 = vshrl.u32 %v71, 7
    %v73 = vsub.s32 0, %v72
    %v74 = vrot.slane %v69, %v73
    %v80 = vunpack.c.l.b16 %v65
    %v81 = vunpack.c.l.b16 %v66
    %v82 = vunpack.c.l.b16 %v67
    %v83 = vunpack.c.l.b16 %v68
    %v84 = vpack.c.b16 %v81, %v80
    %v85 = vpack.c.b16 %v83, %v82
    %vm88 = vcmask 261120
    %v90 = vsel %vm88, %v64, 0
    %92 = vmatprep.subr.bf16.mxu0 0
    %93 = vmatpush1.bf16.msra.mxu0 %v84
    %94 = vmatprep.subr.bf16.mxu0 0
    %95 = vmatpush1.bf16.msra.mxu0 %v85
    %96 = vmatprep.subr.bf16.mxu0 0
    %97 = vmatpush1.bf16.msra.mxu0 0
    %98 = vmatprep.subr.bf16.mxu0 0
    %99 = vmatpush1.bf16.msra.mxu0 0
    %100 = vmatprep.subr.bf16.mxu0 0
    %101 = vmatpush1.bf16.msra.mxu0 0
    %102 = vmatprep.subr.bf16.mxu0 0
    %103 = vmatpush1.bf16.msra.mxu0 0
    %104 = vmatprep.subr.bf16.mxu0 0
    %105 = vmatpush1.bf16.msra.mxu0 0
    %106 = vmatprep.subr.bf16.mxu0 0
    %107 = vmatpush1.bf16.msra.mxu0 0
    %108 = vmatprep.subr.bf16.mxu0 0
    %109 = vmatpush1.bf16.msra.mxu0 0
    %110 = vmatprep.subr.bf16.mxu0 0
    %111 = vmatpush1.bf16.msra.mxu0 0
    %112 = vmatprep.subr.bf16.mxu0 0
    %113 = vmatpush1.bf16.msra.mxu0 0
    %114 = vmatprep.subr.bf16.mxu0 0
    %115 = vmatpush1.bf16.msra.mxu0 0
    %116 = vmatprep.subr.bf16.mxu0 0
    %117 = vmatpush1.bf16.msra.mxu0 0
    %118 = vmatprep.subr.bf16.mxu0 0
    %119 = vmatpush1.bf16.msra.mxu0 0
    %120 = vmatprep.subr.bf16.mxu0 0
    %121 = vmatpush1.bf16.msra.mxu0 0
    %122 = vmatprep.subr.bf16.mxu0 0
    %123 = vmatpush1.bf16.msra.mxu0 0
    %124 = vmatprep.mubr.bf16.mxu0 0
    %125 = vmatmul.mubr.bf16.gmra.mrb[0].mxu0 %v90
    %v126 = vpop.f32.mrb[0].mxu0
    %v127 = vadd.f32 %v74, %v126
    %v128 = vpop.f32.mrb[0].mxu0
    %v129 = vpop.f32.mrb[0].mxu0
    %v130 = vadd.f32 %v74, %v129
    %v131 = vpop.f32.mrb[0].mxu0
    %132 = vdwg.mxu0
    %v133 = vmax.f32 %v127, 0.0
    %v134 = vmax.f32 %v130, 0.0
    %v135 = vpack.c.bf16 %v134, %v133
    %v136 = vld [vmem:[#allocation6] sm:$0xf]
    %v137 = vld [vmem:[#allocation6 + $0x4] sm:$0xf]
    %v138 = vld [vmem:[#allocation6 + $0x8] sm:$0xf]
    %v139 = vld [vmem:[#allocation6 + $0xc] sm:$0xf]
    %v140 = vld [vmem:[#allocation6 + $0x10] sm:$0xf]
    %v141 = vld [vmem:[#allocation6 + $0x14] sm:$0xf]
    %v142 = vld [vmem:[#allocation6 + $0x18] sm:$0xf]
    %v143 = vld [vmem:[#allocation6 + $0x1c] sm:$0xf]
    %v144 = vld [vmem:[#allocation6 + $0x20] sm:$0xf]
    %v145 = vld [vmem:[#allocation6 + $0x24] sm:$0xf]
    %v146 = vld [vmem:[#allocation6 + $0x28] sm:$0xf]
    %v147 = vld [vmem:[#allocation6 + $0x2c] sm:$0xf]
    %v148 = vld [vmem:[#allocation6 + $0x30] sm:$0xf]
    %v149 = vld [vmem:[#allocation6 + $0x34] sm:$0xf]
    %v150 = vld [vmem:[#allocation6 + $0x38] sm:$0xf]
    %v151 = vld [vmem:[#allocation6 + $0x3c] sm:$0xf]
    %v152 = vld [vmem:[%s4] sm:$0x1]
    %v154 = vlaneseq
    %v155 = vshrl.u32 %v154, 7
    %v156 = vsub.s32 0, %v155
    %v157 = vrot.slane %v152, %v156
    %v175 = vunpack.c.l.b16 %v136
    %v176 = vunpack.c.l.b16 %v137
    %v177 = vunpack.c.l.b16 %v138
    %v178 = vunpack.c.l.b16 %v139
    %v179 = vunpack.c.l.b16 %v140
    %v180 = vunpack.c.l.b16 %v141
    %v181 = vunpack.c.l.b16 %v142
    %v182 = vunpack.c.l.b16 %v143
    %v183 = vunpack.c.l.b16 %v144
    %v184 = vunpack.c.l.b16 %v145
    %v185 = vunpack.c.l.b16 %v146
    %v186 = vunpack.c.l.b16 %v147
    %v187 = vunpack.c.l.b16 %v148
    %v188 = vunpack.c.l.b16 %v149
    %v189 = vunpack.c.l.b16 %v150
    %v190 = vunpack.c.l.b16 %v151
    %v191 = vpack.c.b16 %v176, %v175
    %v192 = vpack.c.b16 %v178, %v177
    %v193 = vpack.c.b16 %v180, %v179
    %v194 = vpack.c.b16 %v182, %v181
    %v195 = vpack.c.b16 %v184, %v183
    %v196 = vpack.c.b16 %v186, %v185
    %v197 = vpack.c.b16 %v188, %v187
    %v198 = vpack.c.b16 %v190, %v189
    %207 = vmatprep.subr.bf16.mxu0 0
    %208 = vmatpush1.bf16.msra.mxu0 %v191
    %209 = vmatprep.subr.bf16.mxu0 0
    %210 = vmatpush1.bf16.msra.mxu0 %v192
    %211 = vmatprep.subr.bf16.mxu0 0
    %212 = vmatpush1.bf16.msra.mxu0 %v193
    %213 = vmatprep.subr.bf16.mxu0 0
    %214 = vmatpush1.bf16.msra.mxu0 %v194
    %215 = vmatprep.subr.bf16.mxu0 0
    %216 = vmatpush1.bf16.msra.mxu0 %v195
    %217 = vmatprep.subr.bf16.mxu0 0
    %218 = vmatpush1.bf16.msra.mxu0 %v196
    %219 = vmatprep.subr.bf16.mxu0 0
    %220 = vmatpush1.bf16.msra.mxu0 %v197
    %221 = vmatprep.subr.bf16.mxu0 0
    %222 = vmatpush1.bf16.msra.mxu0 %v198
    %223 = vmatprep.subr.bf16.mxu0 0
    %224 = vmatpush1.bf16.msra.mxu0 0
    %225 = vmatprep.subr.bf16.mxu0 0
    %226 = vmatpush1.bf16.msra.mxu0 0
    %227 = vmatprep.subr.bf16.mxu0 0
    %228 = vmatpush1.bf16.msra.mxu0 0
    %229 = vmatprep.subr.bf16.mxu0 0
    %230 = vmatpush1.bf16.msra.mxu0 0
    %231 = vmatprep.subr.bf16.mxu0 0
    %232 = vmatpush1.bf16.msra.mxu0 0
    %233 = vmatprep.subr.bf16.mxu0 0
    %234 = vmatpush1.bf16.msra.mxu0 0
    %235 = vmatprep.subr.bf16.mxu0 0
    %236 = vmatpush1.bf16.msra.mxu0 0
    %237 = vmatprep.subr.bf16.mxu0 0
    %238 = vmatpush1.bf16.msra.mxu0 0
    %239 = vmatprep.mubr.bf16.mxu0 0
    %240 = vmatmul.mubr.bf16.gmra.mrb[0].mxu0 %v135
    %v241 = vpop.f32.mrb[0].mxu0
    %v242 = vadd.f32 %v157, %v241
    %v243 = vpop.f32.mrb[0].mxu0
    %v244 = vpop.f32.mrb[0].mxu0
    %v245 = vadd.f32 %v157, %v244
    %v246 = vpop.f32.mrb[0].mxu0
    %247 = vdwg.mxu0
    %248 = vst [vmem:[%s5] sm:$0xff] %v242
    %249 = vst [vmem:[%s5 + $0x8] sm:$0xff] %v245
    // Predicated region
    $region34: #{_mlp_apply.1} parent=1 // pred_check
      _
    $region35: #{_mlp_apply.1} parent=1 // pred_check_branch
      %251 = sbr.rel (0) target = $region37
    $region36: #{_mlp_apply.1} parent=1 // pred_region
      _
    $region37: #{_mlp_apply.1} parent=1 // pred_fallthru
      _
    // Predicated region
    $region38: #{_mlp_apply.1} parent=1 // pred_check
      _
    $region39: #{_mlp_apply.1} parent=1 // pred_check_branch
      %253 = sbr.rel (0) target = $region41
    $region40: #{_mlp_apply.1} parent=1 // pred_region
      _
    $region41: #{_mlp_apply.1} parent=1 // pred_fallthru
      _
    %254 = vsyncpa [#allocation3], 1
    %255 = vsyncpa [#allocation5], 1

</llo_original>
